<compile_context>
chip_gen: v7x
topology: tpu7x:2x2x1
jax: 0.10.0
libtpu: 0.0.40
codegen_flags: <defaults>
</compile_context>

<pallas_src>
import jax
import jax.numpy as jnp
from jax.experimental import pallas as pl
from jax.experimental.pallas import tpu as pltpu


def _residual_linear_kernel_f32(x_ref, w_ref, b_ref, o_ref):
    """out = x @ W + b + x; f32 output accumulates directly into o_ref."""
    j = pl.program_id(1)
    k = pl.program_id(2)

    @pl.when(k == 0)
    def _():
        # Fold bias into the accumulator init.
        o_ref[...] = jnp.broadcast_to(b_ref[...], o_ref.shape)

    @pl.when(k == j)
    def _():
        # The LHS tile at k == j is exactly the residual tile x[i, j]
        # (N-tile and K-tile share the same size), so no second x stream.
        o_ref[...] += x_ref[...]

    o_ref[...] += jnp.dot(x_ref[...], w_ref[...],
                          preferred_element_type=jnp.float32)


def _residual_linear_kernel_lowp(x_ref, w_ref, b_ref, o_ref, acc_ref):
    """Same math, but with an f32 VMEM accumulator for low-precision outputs."""
    j = pl.program_id(1)
    k = pl.program_id(2)

    @pl.when(k == 0)
    def _():
        acc_ref[...] = jnp.broadcast_to(
            b_ref[...].astype(jnp.float32), acc_ref.shape)

    @pl.when(k == j)
    def _():
        acc_ref[...] += x_ref[...].astype(jnp.float32)

    acc_ref[...] += jnp.dot(x_ref[...], w_ref[...],
                            preferred_element_type=jnp.float32)

    @pl.when(k == pl.num_programs(2) - 1)
    def _():
        o_ref[...] = acc_ref[...].astype(o_ref.dtype)


def _round_up(v, m):
    return (v + m - 1) // m * m


def _min_sublane(dtype):
    # 8 rows for 4-byte dtypes, 16 for bf16/fp16, 32 for int8/fp8.
    return max(8, 32 // jnp.dtype(dtype).itemsize)


def residual_linear(x, w, b, *, tm=512, td=512):
    """Residual(fn=Linear(w, b))(x) for x of shape (..., D)."""
    orig_shape = x.shape
    d = orig_shape[-1]
    x2 = x.reshape(-1, d)                     # (N, D): tokens on sublanes
    n = x2.shape[0]

    # Keep the matmul in the model dtype (bf16 stays bf16 on the MXU).
    w = w.astype(x.dtype)
    b = b.astype(x.dtype)

    # Lane-dense, dtype-aware aligned tiles, shrunk to the (padded) problem.
    sub = _min_sublane(x.dtype)
    tm = min(tm, _round_up(n, sub))           # sublane axis
    td = min(td, _round_up(d, 128))           # lane axis (shared N/K tile)
    n_pad = _round_up(n, tm)
    d_pad = _round_up(d, td)

    # v7x megacore balance: prefer an even number of M row-panels.
    m_tiles = n_pad // tm
    if m_tiles > 1 and m_tiles % 2 == 1 and tm % (2 * sub) == 0:
        tm //= 2
        n_pad = _round_up(n, tm)

    # Pad only when needed (aligned shapes skip the extra HBM passes).
    if n_pad == n and d_pad == d:
        xp = x2
    else:
        xp = jnp.pad(x2, ((0, n_pad - n), (0, d_pad - d)))
    wp = w if d_pad == d else jnp.pad(w, ((0, d_pad - d), (0, d_pad - d)))
    bp = (b if d_pad == d else jnp.pad(b, (0, d_pad - d))).reshape(1, d_pad)

    grid = (n_pad // tm, d_pad // td, d_pad // td)   # (M tiles, N tiles, K tiles)

    f32_out = jnp.dtype(x.dtype) == jnp.dtype(jnp.float32)
    if f32_out:
        kernel = _residual_linear_kernel_f32
        scratch = []
    else:
        kernel = _residual_linear_kernel_lowp
        scratch = [pltpu.VMEM((tm, td), jnp.float32)]

    itemsize = jnp.dtype(x.dtype).itemsize
    cost = pl.CostEstimate(
        flops=2 * n_pad * d_pad * d_pad,
        transcendentals=0,
        bytes_accessed=(n_pad * d_pad * (d_pad // td)      # x re-streamed per j
                        + d_pad * d_pad * (n_pad // tm)    # W re-streamed per i
                        + n_pad * d_pad) * itemsize)       # output

    out = pl.pallas_call(
        kernel,
        out_shape=jax.ShapeDtypeStruct((n_pad, d_pad), x.dtype),
        grid_spec=pltpu.PrefetchScalarGridSpec(
            num_scalar_prefetch=0,
            grid=grid,
            in_specs=[
                pl.BlockSpec((tm, td), lambda i, j, k: (i, k)),  # x (LHS; residual at k==j)
                pl.BlockSpec((td, td), lambda i, j, k: (k, j)),  # W tile
                pl.BlockSpec((1, td), lambda i, j, k: (0, j)),   # bias
            ],
            out_specs=pl.BlockSpec((tm, td), lambda i, j, k: (i, j)),
            scratch_shapes=scratch,
        ),
        compiler_params=pltpu.CompilerParams(
            dimension_semantics=("parallel", "parallel", "arbitrary")),
        cost_estimate=cost,
    )(xp, wp, bp)

    if n_pad != n or d_pad != d:
        out = out[:n, :d]
    return out.reshape(orig_shape)


def residual_reference(x, w, b):
    """Pure-JAX f32 reference for Residual(Linear)(x)."""
    xf = x.astype(jnp.float32)
    wf = w.astype(jnp.float32)
    bf = b.astype(jnp.float32)
    y = jnp.einsum("...i,ij->...j", xf, wf,
                   precision=jax.lax.Precision.HIGHEST)
    return y + bf + xf


if __name__ == "__main__":
    key = jax.random.PRNGKey(0)
    kx, kw, kb = jax.random.split(key, 3)

    # --- Test 1: f32, small hidden (matches the module's typical shapes). ---
    batch, seq, hidden = 2, 8, 32
    x = jax.random.normal(kx, (batch, seq, hidden), dtype=jnp.float32)
    w = jax.random.normal(kw, (hidden, hidden), dtype=jnp.float32) * 0.05
    b = jax.random.normal(kb, (hidden,), dtype=jnp.float32) * 0.01

    out = residual_linear(x, w, b)
    jax.block_until_ready(out)
    ref = residual_reference(x, w, b)
    assert out.shape == x.shape and out.dtype == x.dtype
    assert jnp.allclose(out, ref, atol=1e-5, rtol=1e-5)

    # --- Test 2: f32, multi-K/N tiles (exercises the k==j residual fold). ---
    hidden2 = 256
    x2 = jax.random.normal(kx, (batch, seq, hidden2), dtype=jnp.float32)
    w2 = jax.random.normal(kw, (hidden2, hidden2), dtype=jnp.float32) * 0.05
    b2 = jax.random.normal(kb, (hidden2,), dtype=jnp.float32) * 0.01

    out2 = residual_linear(x2, w2, b2, td=128)   # force grid (1, 2, 2)
    jax.block_until_ready(out2)
    ref2 = residual_reference(x2, w2, b2)
    assert out2.shape == x2.shape and out2.dtype == x2.dtype
    assert jnp.allclose(out2, ref2, atol=5e-3, rtol=5e-3)

    # --- Test 3: bf16 path (scratch accumulator + bf16 MXU), multi-tile. ---
    x3 = x2.astype(jnp.bfloat16)
    w3 = w2.astype(jnp.bfloat16)
    b3 = b2.astype(jnp.bfloat16)

    out3 = residual_linear(x3, w3, b3, td=128)
    jax.block_until_ready(out3)
    ref3 = residual_reference(x3, w3, b3)
    assert out3.shape == x3.shape and out3.dtype == x3.dtype
    assert jnp.allclose(out3.astype(jnp.float32), ref3, atol=5e-2, rtol=5e-2)

    print("KERNEL_OK")
</pallas_src>

<mosaic_0001>
module attributes {stable_mosaic.version = 11 : i64} {
  func.func @_residual_linear_kernel_f32(%arg0: i32, %arg1: i32, %arg2: i32, %arg3: memref<16x128xf32, #tpu.memory_space<vmem>>, %arg4: memref<128x128xf32, #tpu.memory_space<vmem>>, %arg5: memref<1x128xf32, #tpu.memory_space<vmem>>, %arg6: memref<16x128xf32, #tpu.memory_space<vmem>>) attributes {dimension_semantics = [#tpu.dimension_semantics<parallel>, #tpu.dimension_semantics<parallel>, #tpu.dimension_semantics<arbitrary>], iteration_bounds = array<i64: 1, 1, 1>, scalar_prefetch = 0 : i64, scratch_operands = 0 : i64, tpu.core_type = #tpu.core_type<tc>, window_params = [{transform_indices = @transform_0, window_bounds = array<i64: 16, 128>}, {transform_indices = @transform_1, window_bounds = array<i64: 128, 128>}, {transform_indices = @transform_2, window_bounds = array<i64: 1, 128>}, {transform_indices = @transform_3, window_bounds = array<i64: 16, 128>}]} {
    %c0_i32 = arith.constant 0 : i32
    %0 = arith.cmpi eq, %arg2, %c0_i32 : i32
    %1 = arith.extui %0 : i1 to i32
    %c0_i32_0 = arith.constant 0 : i32
    %2 = arith.cmpi ne, %1, %c0_i32_0 : i32
    scf.if %2 {
      %c0_9 = arith.constant 0 : index
      %c0_10 = arith.constant 0 : index
      %12 = vector.load %arg5[%c0_9, %c0_10] : memref<1x128xf32, #tpu.memory_space<vmem>>, vector<1x128xf32>
      %13 = vector.shape_cast %12 : vector<1x128xf32> to vector<1x128xf32>
      %14 = vector.broadcast %13 : vector<1x128xf32> to vector<16x128xf32>
      %c0_11 = arith.constant 0 : index
      %c0_12 = arith.constant 0 : index
      %15 = vector.load %arg6[%c0_11, %c0_12] : memref<16x128xf32, #tpu.memory_space<vmem>>, vector<16x128xf32>
      tpu.vector_store %arg6[%c0_11, %c0_12], %14 {strides = array<i32>} : memref<16x128xf32, #tpu.memory_space<vmem>>, vector<16x128xf32>,
    } else {
    }
    %3 = arith.cmpi eq, %arg2, %arg1 : i32
    %4 = arith.extui %3 : i1 to i32
    %c0_i32_1 = arith.constant 0 : i32
    %5 = arith.cmpi ne, %4, %c0_i32_1 : i32
    scf.if %5 {
      %c0_9 = arith.constant 0 : index
      %c0_10 = arith.constant 0 : index
      %12 = vector.load %arg6[%c0_9, %c0_10] : memref<16x128xf32, #tpu.memory_space<vmem>>, vector<16x128xf32>
      %c0_11 = arith.constant 0 : index
      %c0_12 = arith.constant 0 : index
      %13 = vector.load %arg3[%c0_11, %c0_12] : memref<16x128xf32, #tpu.memory_space<vmem>>, vector<16x128xf32>
      %14 = arith.addf %12, %13 : vector<16x128xf32>
      %c0_13 = arith.constant 0 : index
      %c0_14 = arith.constant 0 : index
      %15 = vector.load %arg6[%c0_13, %c0_14] : memref<16x128xf32, #tpu.memory_space<vmem>>, vector<16x128xf32>
      tpu.vector_store %arg6[%c0_13, %c0_14], %14 {strides = array<i32>} : memref<16x128xf32, #tpu.memory_space<vmem>>, vector<16x128xf32>,
    } else {
    }
    %c0 = arith.constant 0 : index
    %c0_2 = arith.constant 0 : index
    %6 = vector.load %arg6[%c0, %c0_2] : memref<16x128xf32, #tpu.memory_space<vmem>>, vector<16x128xf32>
    %c0_3 = arith.constant 0 : index
    %c0_4 = arith.constant 0 : index
    %7 = vector.load %arg3[%c0_3, %c0_4] : memref<16x128xf32, #tpu.memory_space<vmem>>, vector<16x128xf32>
    %c0_5 = arith.constant 0 : index
    %c0_6 = arith.constant 0 : index
    %8 = vector.load %arg4[%c0_5, %c0_6] : memref<128x128xf32, #tpu.memory_space<vmem>>, vector<128x128xf32>
    %cst = arith.constant dense<0.000000e+00> : vector<16x128xf32>
    %9 = tpu.matmul %7, %8, %cst {dimension_numbers = #tpu.dot_dimension_numbers<[1], [0], [0], [1], [0, 0, 1, 1], [], []>} : vector<16x128xf32>, vector<128x128xf32>, vector<16x128xf32> -> vector<16x128xf32>
    %10 = arith.addf %6, %9 : vector<16x128xf32>
    %c0_7 = arith.constant 0 : index
    %c0_8 = arith.constant 0 : index
    %11 = vector.load %arg6[%c0_7, %c0_8] : memref<16x128xf32, #tpu.memory_space<vmem>>, vector<16x128xf32>
    tpu.vector_store %arg6[%c0_7, %c0_8], %10 {strides = array<i32>} : memref<16x128xf32, #tpu.memory_space<vmem>>, vector<16x128xf32>,
    return
  }
  func.func @transform_0(%arg0: i32, %arg1: i32, %arg2: i32) -> (i32, i32) {
    %c0_i32 = arith.constant 0 : i32
    return %arg0, %arg2 : i32, i32
  }
  func.func @transform_1(%arg0: i32, %arg1: i32, %arg2: i32) -> (i32, i32) {
    %c0_i32 = arith.constant 0 : i32
    return %arg2, %arg1 : i32, i32
  }
  func.func @transform_2(%arg0: i32, %arg1: i32, %arg2: i32) -> (i32, i32) {
    %c0_i32 = arith.constant 0 : i32
    %c0_i32_0 = arith.constant 0 : i32
    return %c0_i32, %arg1 : i32, i32
  }
  func.func @transform_3(%arg0: i32, %arg1: i32, %arg2: i32) -> (i32, i32) {
    %c0_i32 = arith.constant 0 : i32
    return %arg0, %arg1 : i32, i32
  }
}

</mosaic_0001>

<llo_original>
// kernel: tpu_custom_call.1
$region0: #{tpu_custom_call.1}
  #allocation0 [shape = 'u32[]', space=smem, size = 0x4, offset = 0x4, fixed_abs, tag = 'smem constant byte address 0x4 - core index']
  #allocation1 [shape = 'u32[144,128]{1,0:T(1,128)}', space=vmem, size = 0x12000, scoped, tag = 'internal scratch']
  %s0 = inlined_call_operand.hbm [shape: f32[16,128], index: 0, kind: input, shape index: {}]
  %s1 = inlined_call_operand.hbm [shape: f32[128,128], index: 1, kind: input, shape index: {}]
  %s2 = inlined_call_operand.vmem [shape: f32[1,128], index: 2, kind: input, shape index: {}]
  %s3 = inlined_call_operand.hbm [shape: f32[16,128], index: 3, kind: output, shape index: {}]
  %s4 = sld [smem:[#allocation0]]
  $region38: #{tpu_custom_call.1} parent=0
    _
  %s6 = ssub.s32 1, %s4
  %s7 = scalar_select 0, %s6, %s4
  $region1: #{tpu_custom_call.1} parent=0
    #allocation2 [shape = 'u8[8192]{0}', space=vmem, size = 0x2000, scoped, tag = 'input window, operand 0, single buffered']
    #allocation3 [shape = 's32[1]{0}', space=sflag, size = 0x4, scoped, tag = 'scoped memory for tpu_custom_call.1']
    #allocation4 [shape = 's32[1]{0}', space=sflag, size = 0x4, scoped, tag = 'scoped memory for tpu_custom_call.1']
    #allocation5 [shape = 'u8[65536]{0}', space=vmem, size = 0x10000, scoped, tag = 'input window, operand 1, single buffered']
    #allocation6 [shape = 's32[1]{0}', space=sflag, size = 0x4, scoped, tag = 'scoped memory for tpu_custom_call.1']
    #allocation7 [shape = 'u8[8192]{0}', space=vmem, size = 0x2000, scoped, tag = 'output window, operand 0, single buffered']
    %8 = vsyncpa [#allocation3], 0
    %9 = vsyncpa [#allocation6], 0
    %10 = vsyncpa [#allocation4], 0
    // Predicated region
    $region2: #{tpu_custom_call.1} parent=1 // pred_check
      _
    $region3: #{tpu_custom_call.1} parent=1 // pred_check_branch
      %12 = sbr.rel (0) target = $region5
    $region4: #{tpu_custom_call.1} parent=1 // pred_region
      %s14 = ssub.s32 256, 256
      %15 = vsyncadd [#allocation3], %s14
      %s16 = sshll.u32 [#allocation2], 4
      %s17 = int_to_ptr.vmem [resolvable:$true] %s16
      %22 = dma.hbm_to_vmem [thread:$0]  %s0, 256, %s17, [#allocation3], 128, 128, 8
    $region5: #{tpu_custom_call.1} parent=1 // pred_fallthru
      _
    // Predicated region
    $region6: #{tpu_custom_call.1} parent=1 // pred_check
      _
    $region7: #{tpu_custom_call.1} parent=1 // pred_check_branch
      %24 = sbr.rel (0) target = $region9
    $region8: #{tpu_custom_call.1} parent=1 // pred_region
      %s26 = ssub.s32 2048, 2048
      %27 = vsyncadd [#allocation6], %s26
      %s28 = sshll.u32 [#allocation5], 4
      %s29 = int_to_ptr.vmem [resolvable:$true] %s28
      %34 = dma.hbm_to_vmem [thread:$0]  %s1, 2048, %s29, [#allocation6], 128, 128, 8
    $region9: #{tpu_custom_call.1} parent=1 // pred_fallthru
      _
    // Predicated region
    $region10: #{tpu_custom_call.1} parent=1 // pred_check
      _
    $region11: #{tpu_custom_call.1} parent=1 // pred_check_branch
      %36 = sbr.rel (0) target = $region13
    $region12: #{tpu_custom_call.1} parent=1 // pred_region
      _
    $region13: #{tpu_custom_call.1} parent=1 // pred_fallthru
      _
    // Predicated region
    $region14: #{tpu_custom_call.1} parent=1 // pred_check
      _
    $region15: #{tpu_custom_call.1} parent=1 // pred_check_branch
      %38 = sbr.rel (0) target = $region17
    $region16: #{tpu_custom_call.1} parent=1 // pred_region
      %39 = dma.done [#allocation3], 256
    $region17: #{tpu_custom_call.1} parent=1 // pred_fallthru
      _
    // Predicated region
    $region18: #{tpu_custom_call.1} parent=1 // pred_check
      _
    $region19: #{tpu_custom_call.1} parent=1 // pred_check_branch
      %41 = sbr.rel (0) target = $region21
    $region20: #{tpu_custom_call.1} parent=1 // pred_region
      %42 = dma.done [#allocation6], 2048
    $region21: #{tpu_custom_call.1} parent=1 // pred_fallthru
      _
    %p43 = scmp.eq.s32.totalorder 0, 0
    // Predicated region
    $region22: #{tpu_custom_call.1} parent=1 // pred_check
      %p44 = pneg %p43
    $region23: #{tpu_custom_call.1} parent=1 // pred_check_branch
      %46 = sbr.rel (%p44) target = $region25
    $region24: #{tpu_custom_call.1} parent=1 // pred_region
      %v47 = vld [vmem:[%s2] sm:$0x1]
      %v49 = vlaneseq
      %v50 = vshrl.u32 %v49, 7
      %v51 = vsub.s32 0, %v50
      %v52 = vrot.slane %v47, %v51
      %54 = vst [vmem:[#allocation7] sm:$0xff] %v52
      %55 = vst [vmem:[#allocation7 + $0x8] sm:$0xff] %v52
    $region25: #{tpu_custom_call.1} parent=1 // pred_fallthru
      _
    %p56 = scmp.eq.s32.totalorder 0, 0
    // Predicated region
    $region26: #{tpu_custom_call.1} parent=1 // pred_check
      %p57 = pneg %p56
    $region27: #{tpu_custom_call.1} parent=1 // pred_check_branch
      %59 = sbr.rel (%p57) target = $region29
    $region28: #{tpu_custom_call.1} parent=1 // pred_region
      %v60 = vld [vmem:[#allocation7] sm:$0xff]
      %v61 = vld [vmem:[#allocation7 + $0x8] sm:$0xff]
      %v62 = vld [vmem:[#allocation2] sm:$0xff]
      %v63 = vld [vmem:[#allocation2 + $0x8] sm:$0xff]
      %v64 = vadd.f32 %v60, %v62
      %v65 = vadd.f32 %v61, %v63
      %66 = vst [vmem:[#allocation7] sm:$0xff] %v64
      %67 = vst [vmem:[#allocation7 + $0x8] sm:$0xff] %v65
    $region29: #{tpu_custom_call.1} parent=1 // pred_fallthru
      _
    %v68 = vld [vmem:[#allocation7] sm:$0xff]
    %v69 = vld [vmem:[#allocation7 + $0x8] sm:$0xff]
    %v70 = vld [vmem:[#allocation2] sm:$0xff]
    %v71 = vld [vmem:[#allocation2 + $0x8] sm:$0xff]
    %v72 = vld [vmem:[#allocation5] sm:$0xff]
    %v73 = vld [vmem:[#allocation5 + $0x8] sm:$0xff]
    %v74 = vld [vmem:[#allocation5 + $0x10] sm:$0xff]
    %v75 = vld [vmem:[#allocation5 + $0x18] sm:$0xff]
    %v76 = vld [vmem:[#allocation5 + $0x20] sm:$0xff]
    %v77 = vld [vmem:[#allocation5 + $0x28] sm:$0xff]
    %v78 = vld [vmem:[#allocation5 + $0x30] sm:$0xff]
    %v79 = vld [vmem:[#allocation5 + $0x38] sm:$0xff]
    %v80 = vld [vmem:[#allocation5 + $0x40] sm:$0xff]
    %v81 = vld [vmem:[#allocation5 + $0x48] sm:$0xff]
    %v82 = vld [vmem:[#allocation5 + $0x50] sm:$0xff]
    %v83 = vld [vmem:[#allocation5 + $0x58] sm:$0xff]
    %v84 = vld [vmem:[#allocation5 + $0x60] sm:$0xff]
    %v85 = vld [vmem:[#allocation5 + $0x68] sm:$0xff]
    %v86 = vld [vmem:[#allocation5 + $0x70] sm:$0xff]
    %v87 = vld [vmem:[#allocation5 + $0x78] sm:$0xff]
    %88 = vmatprep.subr.mxu0 0.0
    %89 = vmatpush1.msra.mxu0 %v72
    %90 = vmatprep.subr.mxu0 0.0
    %91 = vmatpush1.msra.mxu0 %v73
    %92 = vmatprep.subr.mxu0 0.0
    %93 = vmatpush1.msra.mxu0 %v74
    %94 = vmatprep.subr.mxu0 0.0
    %95 = vmatpush1.msra.mxu0 %v75
    %96 = vmatprep.subr.mxu0 0.0
    %97 = vmatpush1.msra.mxu0 %v76
    %98 = vmatprep.subr.mxu0 0.0
    %99 = vmatpush1.msra.mxu0 %v77
    %100 = vmatprep.subr.mxu0 0.0
    %101 = vmatpush1.msra.mxu0 %v78
    %102 = vmatprep.subr.mxu0 0.0
    %103 = vmatpush1.msra.mxu0 %v79
    %104 = vmatprep.subr.mxu0 0.0
    %105 = vmatpush1.msra.mxu0 %v80
    %106 = vmatprep.subr.mxu0 0.0
    %107 = vmatpush1.msra.mxu0 %v81
    %108 = vmatprep.subr.mxu0 0.0
    %109 = vmatpush1.msra.mxu0 %v82
    %110 = vmatprep.subr.mxu0 0.0
    %111 = vmatpush1.msra.mxu0 %v83
    %112 = vmatprep.subr.mxu0 0.0
    %113 = vmatpush1.msra.mxu0 %v84
    %114 = vmatprep.subr.mxu0 0.0
    %115 = vmatpush1.msra.mxu0 %v85
    %116 = vmatprep.subr.mxu0 0.0
    %117 = vmatpush1.msra.mxu0 %v86
    %118 = vmatprep.subr.mxu0 0.0
    %119 = vmatpush1.msra.mxu0 %v87
    %120 = vmatprep.subr.mxu0 0.0
    %121 = vmatpush1.msra.mxu0 0.0
    %122 = vmatprep.subr.mxu0 0.0
    %123 = vmatpush1.msra.mxu0 0.0
    %124 = vmatprep.subr.mxu0 0.0
    %125 = vmatpush1.msra.mxu0 0.0
    %126 = vmatprep.subr.mxu0 0.0
    %127 = vmatpush1.msra.mxu0 0.0
    %128 = vmatprep.subr.mxu0 0.0
    %129 = vmatpush1.msra.mxu0 0.0
    %130 = vmatprep.subr.mxu0 0.0
    %131 = vmatpush1.msra.mxu0 0.0
    %132 = vmatprep.subr.mxu0 0.0
    %133 = vmatpush1.msra.mxu0 0.0
    %134 = vmatprep.subr.mxu0 0.0
    %135 = vmatpush1.msra.mxu0 0.0
    %136 = vmatprep.subr.mxu0 0.0
    %137 = vmatpush1.msra.mxu0 0.0
    %138 = vmatprep.subr.mxu0 0.0
    %139 = vmatpush1.msra.mxu0 0.0
    %140 = vmatprep.subr.mxu0 0.0
    %141 = vmatpush1.msra.mxu0 0.0
    %142 = vmatprep.subr.mxu0 0.0
    %143 = vmatpush1.msra.mxu0 0.0
    %144 = vmatprep.subr.mxu0 0.0
    %145 = vmatpush1.msra.mxu0 0.0
    %146 = vmatprep.subr.mxu0 0.0
    %147 = vmatpush1.msra.mxu0 0.0
    %148 = vmatprep.subr.mxu0 0.0
    %149 = vmatpush1.msra.mxu0 0.0
    %150 = vmatprep.subr.mxu0 0.0
    %151 = vmatpush1.msra.mxu0 0.0
    %152 = vmatprep.mubr.f32.mxu0 0.0
    %153 = vmatmul.mubr.f32.gmra.mrb[0].mxu0 %v70
    %v154 = vpop.f32.mrb[0].mxu0
    %v155 = vadd.f32 0.0, %v154
    %v156 = vpop.f32.mrb[0].mxu0
    %157 = vmatprep.mubr.f32.mxu0 0.0
    %158 = vmatmul.mubr.f32.gmra.mrb[0].mxu0 %v71
    %v159 = vpop.f32.mrb[0].mxu0
    %v160 = vadd.f32 0.0, %v159
    %v161 = vpop.f32.mrb[0].mxu0
    %162 = vdwg.mxu0
    %v163 = vadd.f32 %v68, %v155
    %v164 = vadd.f32 %v69, %v160
    %165 = vst [vmem:[#allocation7] sm:$0xff] %v163
    %166 = vst [vmem:[#allocation7 + $0x8] sm:$0xff] %v164
    // Predicated region
    $region30: #{tpu_custom_call.1} parent=1 // pred_check
      _
    $region31: #{tpu_custom_call.1} parent=1 // pred_check_branch
      %168 = sbr.rel (0) target = $region33
    $region32: #{tpu_custom_call.1} parent=1 // pred_region
      %s170 = ssub.s32 256, 256
      %171 = vsyncadd [#allocation4], %s170
      %s172 = sshll.u32 [#allocation7], 4
      %s173 = int_to_ptr.vmem [resolvable:$true] %s172
      %178 = dma.vmem_to_hbm [thread:$0]  %s173, 256, %s3, [#allocation4], 128, 128, 8
    $region33: #{tpu_custom_call.1} parent=1 // pred_fallthru
      _
    // Predicated region
    $region34: #{tpu_custom_call.1} parent=1 // pred_check
      _
    $region35: #{tpu_custom_call.1} parent=1 // pred_check_branch
      %180 = sbr.rel (0) target = $region37
    $region36: #{tpu_custom_call.1} parent=1 // pred_region
      %181 = dma.done [#allocation4], 256
    $region37: #{tpu_custom_call.1} parent=1 // pred_fallthru
      _
    %182 = vsyncpa [#allocation3], 1
    %183 = vsyncpa [#allocation6], 1
    %184 = vsyncpa [#allocation4], 1

</llo_original>
